<compile_context>
chip_gen: v5e
topology: v5e:2x2
jax: 0.10.0
libtpu: 0.0.40
codegen_flags: <defaults>
</compile_context>

<pallas_src>
import functools

import jax
import jax.numpy as jnp
from jax import lax
from jax.experimental import pallas as pl
from jax.experimental.pallas import tpu as pltpu

LANES = 128
SUBLANES = 8
BLOCK_ROWS = 1024          # 1024 x 128 f32 = 512 KiB per plane per buffer


# ---------------------------------------------------------------------------
# Kernels
# ---------------------------------------------------------------------------
def _giou_block(x_ref, *, eps, n_valid, block_rows, has_weight):
    """Per-element (weighted / tail-masked) GIoU loss for one grid block.

    x_ref: (P, block_rows, 128) VMEM ref; planes are
      [pred_start, pred_end, tgt_start, tgt_end, (weight)].
    """
    ps = x_ref[0]
    pe = x_ref[1]
    ts = x_ref[2]
    te = x_ref[3]

    overlap = jnp.maximum(jnp.minimum(pe, te) - jnp.maximum(ps, ts), 0.0)
    union = (pe - ps) + (te - ts) - overlap + eps
    ious = overlap / union
    enclose = jnp.maximum(jnp.maximum(pe, te) - jnp.minimum(ps, ts), 0.0) + eps
    gious = ious - (enclose - union) / enclose
    loss = 1.0 - gious

    if has_weight:
        # Zero-padded weight tail doubles as the valid mask.
        loss = loss * x_ref[4]
    else:
        # No weight plane streamed -> mask the zero-padded tail explicitly
        # (each padded element would otherwise contribute loss == 1).
        row = lax.broadcasted_iota(jnp.int32, (block_rows, LANES), 0)
        lane = lax.broadcasted_iota(jnp.int32, (block_rows, LANES), 1)
        flat = (pl.program_id(0) * block_rows + row) * LANES + lane
        loss = jnp.where(flat < n_valid, loss, 0.0)
    return loss


def _partial_sum_tile(loss):
    """(block_rows,128) -> (8,128) tile: column sums in row 0, zeros elsewhere.

    Writing a full (8,128) tile keeps the output store unmasked and the block
    shape (8,128)-aligned; the wrapper just jnp.sum()s the whole psum array.
    """
    row = lax.broadcasted_iota(jnp.int32, (SUBLANES, LANES), 0)
    return jnp.where(row == 0, jnp.sum(loss, axis=0, keepdims=True), 0.0)


def _giou_sum_kernel(x_ref, psum_ref, *, eps, n_valid, block_rows, has_weight):
    loss = _giou_block(x_ref, eps=eps, n_valid=n_valid,
                       block_rows=block_rows, has_weight=has_weight)
    psum_ref[...] = _partial_sum_tile(loss)


def _giou_full_kernel(x_ref, loss_ref, psum_ref, *, eps, n_valid, block_rows,
                      has_weight):
    loss = _giou_block(x_ref, eps=eps, n_valid=n_valid,
                       block_rows=block_rows, has_weight=has_weight)
    loss_ref[...] = loss
    psum_ref[...] = _partial_sum_tile(loss)


# ---------------------------------------------------------------------------
# Pallas wrapper
# ---------------------------------------------------------------------------
@functools.partial(jax.jit,
                   static_argnames=("eps", "need_elementwise", "block_rows"))
def giou_loss_pallas(pred, target, weight=None, eps=1e-6,
                     need_elementwise=False, block_rows=None):
    """Returns (weighted per-element loss [n] or None, weighted scalar sum)."""
    pred = jnp.asarray(pred, jnp.float32)
    target = jnp.asarray(target, jnp.float32)
    n = pred.shape[0]
    has_weight = weight is not None

    rows = -(-n // LANES)                                # lane rows needed
    rows = -(-rows // SUBLANES) * SUBLANES               # multiple of 8
    if block_rows is None:
        block_rows = min(BLOCK_ROWS, rows)
        # v7x megacore: guarantee >= 2 grid blocks so ("parallel",) can shard
        # the grid across both TensorCores (no-op on single-TC v5e/v6e).
        if rows > SUBLANES and -(-rows // block_rows) == 1:
            block_rows = -(-(rows // 2) // SUBLANES) * SUBLANES
    assert block_rows % SUBLANES == 0 and block_rows > 0
    num_blocks = -(-rows // block_rows)
    rows = num_blocks * block_rows                       # every block is full

    # One stacked SoA slab: (P, n) -> pad -> (P, rows, 128); a single XLA fusion
    # and a single input DMA stream per grid step.
    planes = [pred[:, 0], pred[:, 1], target[:, 0], target[:, 1]]
    if has_weight:
        planes.append(jnp.asarray(weight, jnp.float32).reshape(-1))
    num_planes = len(planes)
    x = jnp.stack(planes, axis=0)
    x = jnp.pad(x, ((0, 0), (0, rows * LANES - n)))
    x = x.reshape(num_planes, rows, LANES)
    # TODO(synk): for truly huge n the stack/pad still round-trips ~4n floats
    # through HBM before the kernel; an in-kernel even/odd-lane deinterleave of
    # the raw (n,2) arrays would remove it.

    kern_kwargs = dict(eps=eps, n_valid=n, block_rows=block_rows,
                       has_weight=has_weight)
    in_specs = [pl.BlockSpec((num_planes, block_rows, LANES),
                             lambda i: (0, i, 0))]
    psum_spec = pl.BlockSpec((SUBLANES, LANES), lambda i: (i, 0))
    psum_shape = jax.ShapeDtypeStruct((num_blocks * SUBLANES, LANES),
                                      jnp.float32)
    cparams = pltpu.CompilerParams(dimension_semantics=("parallel",))

    if need_elementwise:
        loss_slab, psums = pl.pallas_call(
            functools.partial(_giou_full_kernel, **kern_kwargs),
            grid=(num_blocks,),
            in_specs=in_specs,
            out_specs=(pl.BlockSpec((block_rows, LANES), lambda i: (i, 0)),
                       psum_spec),
            out_shape=(jax.ShapeDtypeStruct((rows, LANES), jnp.float32),
                       psum_shape),
            compiler_params=cparams,
        )(x)
        return loss_slab.reshape(-1)[:n], jnp.sum(psums)

    # Sum-only variant: the per-element loss slab is never written to HBM.
    psums = pl.pallas_call(
        functools.partial(_giou_sum_kernel, **kern_kwargs),
        grid=(num_blocks,),
        in_specs=in_specs,
        out_specs=psum_spec,
        out_shape=psum_shape,
        compiler_params=cparams,
    )(x)
    return None, jnp.sum(psums)


# ---------------------------------------------------------------------------
# Pure-JAX reference (also used as the small-n fast path)
# ---------------------------------------------------------------------------
def _giou_ref(pred, target, eps):
    start = jnp.maximum(pred[:, 0], target[:, 0])
    end = jnp.minimum(pred[:, 1], target[:, 1])
    overlap = jnp.maximum(end - start, 0.0)
    ap = pred[:, 1] - pred[:, 0]
    ag = target[:, 1] - target[:, 0]
    union = ap + ag - overlap + eps
    ious = overlap / union
    es = jnp.minimum(pred[:, 0], target[:, 0])
    ee = jnp.maximum(pred[:, 1], target[:, 1])
    enc = jnp.maximum(ee - es, 0.0) + eps
    gious = ious - (enc - union) / enc
    return 1.0 - gious


# ---------------------------------------------------------------------------
# Module wrapper (mirrors the PyTorch GIoULoss forward semantics)
# ---------------------------------------------------------------------------
class GIoULossPallas:
    def __init__(self, eps=1e-6, reduction='mean', loss_weight=1.0,
                 min_pallas_boxes=4096):
        self.eps = eps
        self.reduction = reduction
        self.loss_weight = loss_weight
        # Below this many boxes a single fused XLA elementwise kernel is
        # strictly faster than pallas_call dispatch + packing.
        self.min_pallas_boxes = min_pallas_boxes

    def __call__(self, pred, target, weight=None, avg_factor=None,
                 reduction_override=None):
        pred = jnp.asarray(pred, jnp.float32)
        target = jnp.asarray(target, jnp.float32)

        if weight is not None:
            weight = jnp.asarray(weight, jnp.float32)
            # PyTorch-parity early return when no weight is positive.  Eager
            # only: under jit the data-dependent check is skipped, which is
            # safe because zero weights already zero the loss via the mask.
            try:
                any_pos = bool(jnp.any(weight > 0))
            except jax.errors.ConcretizationTypeError:
                any_pos = True
            if not any_pos:
                w = weight.reshape(
                    weight.shape + (1,) * (pred.ndim - weight.ndim))
                return (pred * w).sum()

        assert reduction_override in (None, 'none', 'mean', 'sum')
        reduction = reduction_override if reduction_override else self.reduction

        if weight is not None and weight.ndim > 1:
            assert weight.shape == pred.shape
            weight = weight.mean(-1)

        n = pred.shape[0]
        if n < self.min_pallas_boxes:
            # Small-n fast path: fused XLA elementwise expression.
            loss_vec = _giou_ref(pred, target, self.eps)
            if weight is not None:
                loss_vec = loss_vec * weight
            loss_sum = jnp.sum(loss_vec)
        else:
            loss_vec, loss_sum = giou_loss_pallas(
                pred, target, weight, eps=self.eps,
                need_elementwise=(reduction == 'none'))

        if reduction == 'none':
            out = loss_vec
        elif reduction == 'sum':
            out = loss_sum
        else:  # 'mean' (weighted_loss semantics: sum(weighted)/n or /avg_factor)
            denom = float(n) if avg_factor is None else avg_factor
            out = loss_sum / denom
        return self.loss_weight * out


# ---------------------------------------------------------------------------
# Self-test
# ---------------------------------------------------------------------------
if __name__ == "__main__":
    key = jax.random.PRNGKey(0)
    k1, k2, k3, k4, k5 = jax.random.split(key, 5)
    n = 8  # number of 1-D segments (start, end)

    p_start = jax.random.uniform(k1, (n,), jnp.float32, 0.0, 5.0)
    p_len = jax.random.uniform(k2, (n,), jnp.float32, 0.5, 3.0)
    t_start = jax.random.uniform(k3, (n,), jnp.float32, 0.0, 5.0)
    t_len = jax.random.uniform(k4, (n,), jnp.float32, 0.5, 3.0)

    pred = jnp.stack([p_start, p_start + p_len], axis=1)     # (n, 2)
    target = jnp.stack([t_start, t_start + t_len], axis=1)   # (n, 2)

    # Force the Pallas path even at this small size so the TPU kernel runs.
    module = GIoULossPallas(eps=1e-6, reduction='mean', loss_weight=1.0,
                            min_pallas_boxes=0)

    # mean reduction, no weight -> sum-only kernel, no-weight tail masking
    loss = jax.block_until_ready(module(pred, target))
    ref = jnp.mean(_giou_ref(pred, target, 1e-6))
    assert jnp.allclose(loss, ref, atol=1e-5, rtol=1e-5), (loss, ref)

    # 'none' and 'sum' with per-element weights (full and sum-only variants)
    weight = jax.random.uniform(k5, (n,), jnp.float32, 0.0, 2.0)
    ref_none = _giou_ref(pred, target, 1e-6) * weight

    loss_none = jax.block_until_ready(
        module(pred, target, weight=weight, reduction_override='none'))
    assert loss_none.shape == (n,)
    assert jnp.allclose(loss_none, ref_none, atol=1e-5, rtol=1e-5)

    loss_sum = jax.block_until_ready(
        module(pred, target, weight=weight, reduction_override='sum'))
    assert jnp.allclose(loss_sum, jnp.sum(ref_none), atol=1e-4, rtol=1e-5)

    # all-zero weight -> PyTorch-parity eager early return (scalar zero)
    zero = module(pred, target, weight=jnp.zeros((n,), jnp.float32))
    assert float(zero) == 0.0

    # default module takes the fused-XLA small-n fast path
    fast_module = GIoULossPallas(eps=1e-6)
    loss_fast = jax.block_until_ready(fast_module(pred, target))
    assert jnp.allclose(loss_fast, ref, atol=1e-5, rtol=1e-5)

    # Multi-block grid path (block_rows=8 -> 2 grid steps), no-weight masking.
    n2 = 2000
    ka, kb, kc, kd = jax.random.split(jax.random.PRNGKey(1), 4)
    ps2 = jax.random.uniform(ka, (n2,), jnp.float32, 0.0, 10.0)
    plen2 = jax.random.uniform(kb, (n2,), jnp.float32, 0.5, 4.0)
    ts2 = jax.random.uniform(kc, (n2,), jnp.float32, 0.0, 10.0)
    tlen2 = jax.random.uniform(kd, (n2,), jnp.float32, 0.5, 4.0)
    pred2 = jnp.stack([ps2, ps2 + plen2], axis=1)
    target2 = jnp.stack([ts2, ts2 + tlen2], axis=1)
    ref2 = _giou_ref(pred2, target2, 1e-6)

    vec2, sum2 = giou_loss_pallas(pred2, target2, None, eps=1e-6,
                                  need_elementwise=True, block_rows=8)
    jax.block_until_ready((vec2, sum2))
    assert vec2.shape == (n2,)
    assert jnp.allclose(vec2, ref2, atol=1e-5, rtol=1e-5)
    assert jnp.allclose(sum2, jnp.sum(ref2), atol=1e-2, rtol=1e-5)

    _, sum3 = giou_loss_pallas(pred2, target2, None, eps=1e-6,
                               need_elementwise=False, block_rows=8)
    jax.block_until_ready(sum3)
    assert jnp.allclose(sum3, jnp.sum(ref2), atol=1e-2, rtol=1e-5)

    print("KERNEL_OK")
</pallas_src>

<mosaic_0001>
module attributes {stable_mosaic.version = 11 : i64} {
  func.func @_giou_sum_kernel(%arg0: i32, %arg1: memref<4x8x128xf32, #tpu.memory_space<vmem>>, %arg2: memref<8x128xf32, #tpu.memory_space<vmem>>) attributes {dimension_semantics = [#tpu.dimension_semantics<parallel>], iteration_bounds = array<i64: 1>, scalar_prefetch = 0 : i64, scratch_operands = 0 : i64, tpu.core_type = #tpu.core_type<tc>, window_params = [{transform_indices = @transform_0, window_bounds = array<i64: 4, 8, 128>}, {transform_indices = @transform_1, window_bounds = array<i64: 8, 128>}]} {
    %c0 = arith.constant 0 : index
    %c0_0 = arith.constant 0 : index
    %c0_1 = arith.constant 0 : index
    %0 = vector.load %arg1[%c0, %c0_0, %c0_1] : memref<4x8x128xf32, #tpu.memory_space<vmem>>, vector<1x8x128xf32>
    %1 = vector.shape_cast %0 : vector<1x8x128xf32> to vector<8x128xf32>
    %c1 = arith.constant 1 : index
    %c0_2 = arith.constant 0 : index
    %c0_3 = arith.constant 0 : index
    %2 = vector.load %arg1[%c1, %c0_2, %c0_3] : memref<4x8x128xf32, #tpu.memory_space<vmem>>, vector<1x8x128xf32>
    %3 = vector.shape_cast %2 : vector<1x8x128xf32> to vector<8x128xf32>
    %c2 = arith.constant 2 : index
    %c0_4 = arith.constant 0 : index
    %c0_5 = arith.constant 0 : index
    %4 = vector.load %arg1[%c2, %c0_4, %c0_5] : memref<4x8x128xf32, #tpu.memory_space<vmem>>, vector<1x8x128xf32>
    %5 = vector.shape_cast %4 : vector<1x8x128xf32> to vector<8x128xf32>
    %c3 = arith.constant 3 : index
    %c0_6 = arith.constant 0 : index
    %c0_7 = arith.constant 0 : index
    %6 = vector.load %arg1[%c3, %c0_6, %c0_7] : memref<4x8x128xf32, #tpu.memory_space<vmem>>, vector<1x8x128xf32>
    %7 = vector.shape_cast %6 : vector<1x8x128xf32> to vector<8x128xf32>
    %8 = arith.minimumf %3, %7 : vector<8x128xf32>
    %9 = arith.maximumf %1, %5 : vector<8x128xf32>
    %10 = arith.subf %8, %9 : vector<8x128xf32>
    %cst = arith.constant 0.000000e+00 : f32
    %11 = vector.broadcast %cst : f32 to vector<8x128xf32>
    %12 = arith.maximumf %10, %11 : vector<8x128xf32>
    %13 = arith.subf %3, %1 : vector<8x128xf32>
    %14 = arith.subf %7, %5 : vector<8x128xf32>
    %15 = arith.addf %13, %14 : vector<8x128xf32>
    %16 = arith.subf %15, %12 : vector<8x128xf32>
    %cst_8 = arith.constant 9.99999997E-7 : f32
    %17 = vector.broadcast %cst_8 : f32 to vector<8x128xf32>
    %18 = arith.addf %16, %17 : vector<8x128xf32>
    %19 = arith.divf %12, %18 : vector<8x128xf32>
    %20 = arith.maximumf %3, %7 : vector<8x128xf32>
    %21 = arith.minimumf %1, %5 : vector<8x128xf32>
    %22 = arith.subf %20, %21 : vector<8x128xf32>
    %cst_9 = arith.constant 0.000000e+00 : f32
    %23 = vector.broadcast %cst_9 : f32 to vector<8x128xf32>
    %24 = arith.maximumf %22, %23 : vector<8x128xf32>
    %cst_10 = arith.constant 9.99999997E-7 : f32
    %25 = vector.broadcast %cst_10 : f32 to vector<8x128xf32>
    %26 = arith.addf %24, %25 : vector<8x128xf32>
    %27 = arith.subf %26, %18 : vector<8x128xf32>
    %28 = arith.divf %27, %26 : vector<8x128xf32>
    %29 = arith.subf %19, %28 : vector<8x128xf32>
    %cst_11 = arith.constant 1.000000e+00 : f32
    %30 = vector.broadcast %cst_11 : f32 to vector<8x128xf32>
    %31 = arith.subf %30, %29 : vector<8x128xf32>
    %32 = tpu.iota {dimensions = array<i32: 0>} : vector<8x128xi32>
    %33 = tpu.iota {dimensions = array<i32: 1>} : vector<8x128xi32>
    %c8_i32 = arith.constant 8 : i32
    %34 = arith.muli %arg0, %c8_i32 : i32
    %35 = vector.broadcast %34 : i32 to vector<8x128xi32>
    %36 = arith.addi %35, %32 : vector<8x128xi32>
    %c128_i32 = arith.constant 128 : i32
    %37 = vector.broadcast %c128_i32 : i32 to vector<8x128xi32>
    %38 = arith.muli %36, %37 : vector<8x128xi32>
    %39 = arith.addi %38, %33 : vector<8x128xi32>
    %c8_i32_12 = arith.constant 8 : i32
    %40 = vector.broadcast %c8_i32_12 : i32 to vector<8x128xi32>
    %41 = arith.cmpi slt, %39, %40 : vector<8x128xi32>
    %cst_13 = arith.constant 0.000000e+00 : f32
    %42 = vector.broadcast %cst_13 : f32 to vector<8x128xf32>
    %43 = arith.select %41, %31, %42 : vector<8x128xi1>, vector<8x128xf32>
    %44 = tpu.iota {dimensions = array<i32: 0>} : vector<8x128xi32>
    %c0_i32 = arith.constant 0 : i32
    %45 = vector.broadcast %c0_i32 : i32 to vector<8x128xi32>
    %46 = arith.cmpi eq, %44, %45 : vector<8x128xi32>
    %cst_14 = arith.constant dense<0.000000e+00> : vector<128xf32>
    %47 = vector.multi_reduction <add>, %43, %cst_14 [0] : vector<8x128xf32> to vector<128xf32>
    %48 = vector.shape_cast %47 : vector<128xf32> to vector<1x128xf32>
    %cst_15 = arith.constant 0.000000e+00 : f32
    %49 = vector.shape_cast %48 : vector<1x128xf32> to vector<1x128xf32>
    %50 = vector.broadcast %49 : vector<1x128xf32> to vector<8x128xf32>
    %51 = vector.broadcast %cst_15 : f32 to vector<8x128xf32>
    %52 = arith.select %46, %50, %51 : vector<8x128xi1>, vector<8x128xf32>
    %c0_16 = arith.constant 0 : index
    %c0_17 = arith.constant 0 : index
    %53 = vector.load %arg2[%c0_16, %c0_17] : memref<8x128xf32, #tpu.memory_space<vmem>>, vector<8x128xf32>
    tpu.vector_store %arg2[%c0_16, %c0_17], %52 {strides = array<i32>} : memref<8x128xf32, #tpu.memory_space<vmem>>, vector<8x128xf32>,
    return
  }
  func.func @transform_0(%arg0: i32) -> (i32, i32, i32) {
    %c0_i32 = arith.constant 0 : i32
    %c0_i32_0 = arith.constant 0 : i32
    %c0_i32_1 = arith.constant 0 : i32
    return %c0_i32, %arg0, %c0_i32_0 : i32, i32, i32
  }
  func.func @transform_1(%arg0: i32) -> (i32, i32) {
    %c0_i32 = arith.constant 0 : i32
    %c0_i32_0 = arith.constant 0 : i32
    return %arg0, %c0_i32 : i32, i32
  }
}

</mosaic_0001>

<llo_original>
// kernel: giou_loss_pallas.1
$region0: #{giou_loss_pallas.1}
  #allocation0 [shape = 'u32[]', space=smem, size = 0x4, offset = 0x4, fixed_abs, tag = 'smem constant byte address 0x4 - core index']
  #allocation1 [shape = 'u32[72,128]{1,0:T(1,128)}', space=vmem, size = 0x9000, scoped, tag = 'internal scratch']
  %s0 = inlined_call_operand.vmem [shape: f32[4,8,128], index: 0, kind: input, shape index: {}]
  %s1 = inlined_call_operand.vmem [shape: f32[8,128], index: 1, kind: output, shape index: {}]
  %s2 = sld [smem:[#allocation0]]
  $region14: #{giou_loss_pallas.1} parent=0
    _
  %s4 = ssub.s32 1, %s2
  %s5 = scalar_select 0, %s4, %s2
  // Predicated region
  $region2: #{giou_loss_pallas.1} parent=0 // pred_check
    _
  $region3: #{giou_loss_pallas.1} parent=0 // pred_check_branch
    %7 = sbr.rel (0) target = $region5
  $region4: #{giou_loss_pallas.1} parent=0 // pred_region
    _
  $region5: #{giou_loss_pallas.1} parent=0 // pred_fallthru
    _
  %v8 = vld [vmem:[%s0] sm:$0xff]
  %s9 = scalar_lea.vmem %s0, 8
  %v10 = vld [vmem:[%s9] sm:$0xff]
  %s11 = scalar_lea.vmem %s0, 16
  %v12 = vld [vmem:[%s11] sm:$0xff]
  %s13 = scalar_lea.vmem %s0, 24
  %v14 = vld [vmem:[%s13] sm:$0xff]
  %v15 = vmin.f32 %v10, %v14
  %v16 = vmax.f32 %v8, %v12
  %v17 = vsub.f32 %v15, %v16
  %v18 = vmax.f32 %v17, 0.0
  %v19 = vsub.f32 %v10, %v8
  %v20 = vsub.f32 %v14, %v12
  %v21 = vadd.f32 %v19, %v20
  %v22 = vsub.f32 %v21, %v18
  %v23 = vadd.f32 %v22, 1e-06
  %v24 = vrcp.pop %v23
  %v25 = vmul.f32 %v23, %v24
  %v26 = vsub.f32 1.0, %v25
  %v27 = vmul.f32 %v24, %v26
  %v28 = vadd.f32 %v24, %v27
  %vm29 = vweird.f32 %v23
  %vm30 = vweird.f32 %v24
  %vm31 = vmor %vm29, %vm30
  %v32 = vsel %vm31, %v24, %v28
  %v33 = vand.u32 2147483647, %v23
  %vm34 = vcmp.eq.f32.partialorder %v33, 8.507059e+37
  %v35 = vand.u32 %v23, 2147483648
  %v36 = vor.u32 1.1754944e-38, %v35
  %v37 = vsel %vm34, %v36, %v32
  %v38 = vmul.f32 %v18, %v37
  %v39 = vmax.f32 %v10, %v14
  %v40 = vmin.f32 %v8, %v12
  %v41 = vsub.f32 %v39, %v40
  %v42 = vmax.f32 %v41, 0.0
  %v43 = vadd.f32 %v42, 1e-06
  %v44 = vsub.f32 %v43, %v23
  %v45 = vrcp.pop %v43
  %v46 = vmul.f32 %v43, %v45
  %v47 = vsub.f32 1.0, %v46
  %v48 = vmul.f32 %v45, %v47
  %v49 = vadd.f32 %v45, %v48
  %vm50 = vweird.f32 %v43
  %vm51 = vweird.f32 %v45
  %vm52 = vmor %vm50, %vm51
  %v53 = vsel %vm52, %v45, %v49
  %v54 = vand.u32 2147483647, %v43
  %vm55 = vcmp.eq.f32.partialorder %v54, 8.507059e+37
  %v56 = vand.u32 %v43, 2147483648
  %v57 = vor.u32 1.1754944e-38, %v56
  %v58 = vsel %vm55, %v57, %v53
  %v59 = vmul.f32 %v44, %v58
  %v60 = vsub.f32 %v38, %v59
  %v61 = vsub.f32 1.0, %v60
  %v62 = vlaneseq
  %v63 = vshrl.u32 %v62, 7
  %v64 = vlaneseq
  %v65 = vand.u32 %v64, 127
  %s66 = smul.u32 0, 8
  %v67 = vstv %s66
  %v68 = vadd.s32 %v67, %v63
  %v69 = vmul.u32 %v68, 128
  %v70 = vadd.s32 %v69, %v65
  %vm71 = vcmp.lt.s32.totalorder %v70, 8
  %v72 = vsel %vm71, %v61, 0.0
  %vm73 = vcmp.eq.s32.totalorder %v63, 0
  %v74 = vrot.slane %v72, 4
  %v75 = vadd.f32 %v72, %v74
  %v76 = vrot.slane %v75, 2
  %v77 = vadd.f32 %v75, %v76
  %v78 = vrot.slane %v77, 1
  %v79 = vadd.f32 %v77, %v78
  %v80 = vsel %vm73, %v79, 0.0
  %81 = vst [vmem:[%s1] sm:$0xff] %v80
  // Predicated region
  $region6: #{giou_loss_pallas.1} parent=0 // pred_check
    _
  $region7: #{giou_loss_pallas.1} parent=0 // pred_check_branch
    %83 = sbr.rel (0) target = $region9
  $region8: #{giou_loss_pallas.1} parent=0 // pred_region
    _
  $region9: #{giou_loss_pallas.1} parent=0 // pred_fallthru
    _
  // Predicated region
  $region10: #{giou_loss_pallas.1} parent=0 // pred_check
    _
  $region11: #{giou_loss_pallas.1} parent=0 // pred_check_branch
    %85 = sbr.rel (0) target = $region13
  $region12: #{giou_loss_pallas.1} parent=0 // pred_region
    _
  $region13: #{giou_loss_pallas.1} parent=0 // pred_fallthru
    _

</llo_original>
